<compile_context>
chip_gen: v7x
topology: tpu7x:2x2x1
jax: 0.10.0
libtpu: 0.0.40
codegen_flags: <defaults>
</compile_context>

<pallas_src>
import functools

import jax
import jax.numpy as jnp
from jax.experimental import pallas as pl
from jax.experimental.pallas import tpu as pltpu


def _round_up(x: int, m: int) -> int:
    return ((x + m - 1) // m) * m


def rnn_cell_kernel(xh_ref, w_ref, b_ref, o_ref, acc_ref):
    """Fused GEMM + bias + tanh.  Grid = (M_tiles, N_tiles, K_tiles)."""
    k = pl.program_id(2)

    @pl.when(k == 0)
    def _():
        acc_ref[...] = jnp.zeros_like(acc_ref)

    # Single MXU push per (i, j, k) step; f32 accumulation.
    acc_ref[...] += jnp.dot(xh_ref[...], w_ref[...],
                            preferred_element_type=jnp.float32)

    @pl.when(k == pl.num_programs(2) - 1)
    def _():
        # bias add + tanh (EUP) fused into the epilogue; dropout(p=0) is identity.
        o_ref[...] = jnp.tanh(acc_ref[...] + b_ref[...]).astype(o_ref.dtype)


def prepare_rnn_cell_params(weight_xh, weight_hh, bias_xh, bias_hh,
                            dtype=jnp.float32):
    """One-time parameter reformat (do this once, not per timestep).

    weight_xh: (hidden, input_size)
    weight_hh: (hidden, hidden)
    bias_xh:   (hidden,)
    bias_hh:   (hidden,)
    dtype:     matmul operand dtype (use jnp.bfloat16 on v6e/v7x; keep f32 on v5e)

    Returns (w_fused_padded, b_fused_padded):
      w_fused_padded: (round_up(I+H, 128), round_up(H, 128)), dtype
      b_fused_padded: (1, round_up(H, 128)), float32
    """
    hidden, input_size = weight_xh.shape
    k = input_size + hidden
    kp = _round_up(k, 128)
    np_ = _round_up(hidden, 128)

    # [W_xh.T ; W_hh.T] -> (I+H, H)
    w = jnp.concatenate([weight_xh.T, weight_hh.T], axis=0)
    w = jnp.pad(w, ((0, kp - k), (0, np_ - hidden))).astype(dtype)

    # Pre-summed bias, lane-dense (1, Np) row.
    b = (bias_xh + bias_hh).reshape(1, hidden).astype(jnp.float32)
    b = jnp.pad(b, ((0, 0), (0, np_ - hidden)))
    return w, b


@functools.partial(jax.jit, static_argnames=("hidden_size",))
def rnn_cell(x, h, w_fused, b_fused, hidden_size):
    """Pallas TPU implementation of RNNCell.forward (single step).

    x:        (B, input_size) float32
    h:        (B, hidden)     float32 (or None -> zeros)
    w_fused:  padded fused weight from prepare_rnn_cell_params
    b_fused:  padded fused bias   from prepare_rnn_cell_params
    returns:  (B, hidden) float32
    """
    B, input_size = x.shape
    if h is None:
        h = jnp.zeros((B, hidden_size), dtype=x.dtype)

    kp, np_ = w_fused.shape          # padded K and N
    k = input_size + hidden_size

    # Tile sizes. N/K are already 128-multiples; M padded to a multiple of 8
    # (or of 128 when large enough to tile).
    tn = min(np_, 128)
    tk = min(kp, 512)
    kp = _round_up(kp, tk)
    mp = _round_up(B, 8)
    tm = mp if mp < 128 else 128
    mp = _round_up(mp, tm)

    # Fused activation [x | h], padded and cast to the matmul operand dtype.
    xh = jnp.concatenate([x, h], axis=1)                     # (B, I+H)
    xh = jnp.pad(xh, ((0, mp - B), (0, kp - k))).astype(w_fused.dtype)
    w = jnp.pad(w_fused, ((0, kp - w_fused.shape[0]), (0, 0)))

    grid = (mp // tm, np_ // tn, kp // tk)

    out_padded = pl.pallas_call(
        rnn_cell_kernel,
        out_shape=jax.ShapeDtypeStruct((mp, np_), x.dtype),
        grid_spec=pltpu.PrefetchScalarGridSpec(
            num_scalar_prefetch=0,
            grid=grid,
            in_specs=[
                pl.BlockSpec((tm, tk), lambda i, j, kk: (i, kk)),   # [x|h]
                pl.BlockSpec((tk, tn), lambda i, j, kk: (kk, j)),   # fused W
                pl.BlockSpec((1, tn), lambda i, j, kk: (0, j)),     # fused bias
            ],
            out_specs=pl.BlockSpec((tm, tn), lambda i, j, kk: (i, j)),
            scratch_shapes=[pltpu.VMEM((tm, tn), jnp.float32)],
        ),
        compiler_params=pltpu.CompilerParams(
            dimension_semantics=("parallel", "parallel", "arbitrary"),
        ),
    )(xh, w, b_fused)

    # Strip padding outside the kernel (lane-dense slab inside).
    return out_padded[:B, :hidden_size]


def rnn_cell_ref(x, h, weight_xh, weight_hh, bias_xh, bias_hh):
    """Pure-JAX reference (mirrors the PyTorch forward)."""
    if h is None:
        h = jnp.zeros((x.shape[0], weight_xh.shape[0]), dtype=x.dtype)
    x_gate = x @ weight_xh.T + bias_xh
    h_gate = h @ weight_hh.T + bias_hh
    return jnp.tanh(x_gate + h_gate)


if __name__ == "__main__":
    batch = 2
    input_size = 16
    hidden_size = 32

    key = jax.random.PRNGKey(0)
    kx, kh, kwx, kwh, kbx, kbh = jax.random.split(key, 6)

    x = jax.random.normal(kx, (batch, input_size), dtype=jnp.float32)
    h = jax.random.normal(kh, (batch, hidden_size), dtype=jnp.float32)

    # Deterministic synthetic parameters (shapes match nn.Parameter decls).
    weight_xh = jax.random.normal(kwx, (hidden_size, input_size), jnp.float32) * 0.1
    weight_hh = jax.random.normal(kwh, (hidden_size, hidden_size), jnp.float32) * 0.1
    bias_xh = jax.random.normal(kbx, (hidden_size,), jnp.float32) * 0.1
    bias_hh = jax.random.normal(kbh, (hidden_size,), jnp.float32) * 0.1

    # One-time parameter prep (transpose/concat/bias-sum/pad done once).
    # On v6e/v7x pass dtype=jnp.bfloat16 for MXU-native operands.
    w_fused, b_fused = prepare_rnn_cell_params(
        weight_xh, weight_hh, bias_xh, bias_hh, dtype=jnp.float32)

    out = rnn_cell(x, h, w_fused, b_fused, hidden_size)
    out = jax.block_until_ready(out)

    ref = rnn_cell_ref(x, h, weight_xh, weight_hh, bias_xh, bias_hh)
    assert out.shape == (batch, hidden_size)
    assert jnp.allclose(out, ref, atol=1e-5, rtol=1e-5)

    # Also exercise the h=None path (zeros init) as in the PyTorch module.
    out_none = jax.block_until_ready(
        rnn_cell(x, None, w_fused, b_fused, hidden_size))
    ref_none = rnn_cell_ref(x, None, weight_xh, weight_hh, bias_xh, bias_hh)
    assert jnp.allclose(out_none, ref_none, atol=1e-5, rtol=1e-5)

    print("KERNEL_OK")
</pallas_src>

<mosaic_0001>
module attributes {stable_mosaic.version = 11 : i64} {
  func.func @rnn_cell_kernel(%arg0: i32, %arg1: i32, %arg2: i32, %arg3: memref<8x128xf32, #tpu.memory_space<vmem>>, %arg4: memref<128x128xf32, #tpu.memory_space<vmem>>, %arg5: memref<1x128xf32, #tpu.memory_space<vmem>>, %arg6: memref<8x128xf32, #tpu.memory_space<vmem>>, %arg7: memref<8x128xf32, #tpu.memory_space<vmem>>) attributes {dimension_semantics = [#tpu.dimension_semantics<parallel>, #tpu.dimension_semantics<parallel>, #tpu.dimension_semantics<arbitrary>], iteration_bounds = array<i64: 1, 1, 1>, scalar_prefetch = 0 : i64, scratch_operands = 1 : i64, tpu.core_type = #tpu.core_type<tc>, window_params = [{transform_indices = @transform_0, window_bounds = array<i64: 8, 128>}, {transform_indices = @transform_1, window_bounds = array<i64: 128, 128>}, {transform_indices = @transform_2, window_bounds = array<i64: 1, 128>}, {transform_indices = @transform_3, window_bounds = array<i64: 8, 128>}]} {
    %c0_i32 = arith.constant 0 : i32
    %0 = arith.cmpi eq, %arg2, %c0_i32 : i32
    %1 = arith.extui %0 : i1 to i32
    %c0_i32_0 = arith.constant 0 : i32
    %2 = arith.cmpi ne, %1, %c0_i32_0 : i32
    scf.if %2 {
      %cst_10 = arith.constant 0.000000e+00 : f32
      %12 = vector.broadcast %cst_10 : f32 to vector<8x128xf32>
      %c0_11 = arith.constant 0 : index
      %c0_12 = arith.constant 0 : index
      %13 = vector.load %arg7[%c0_11, %c0_12] : memref<8x128xf32, #tpu.memory_space<vmem>>, vector<8x128xf32>
      tpu.vector_store %arg7[%c0_11, %c0_12], %12 {strides = array<i32>} : memref<8x128xf32, #tpu.memory_space<vmem>>, vector<8x128xf32>,
    } else {
    }
    %c0 = arith.constant 0 : index
    %c0_1 = arith.constant 0 : index
    %3 = vector.load %arg7[%c0, %c0_1] : memref<8x128xf32, #tpu.memory_space<vmem>>, vector<8x128xf32>
    %c0_2 = arith.constant 0 : index
    %c0_3 = arith.constant 0 : index
    %4 = vector.load %arg3[%c0_2, %c0_3] : memref<8x128xf32, #tpu.memory_space<vmem>>, vector<8x128xf32>
    %c0_4 = arith.constant 0 : index
    %c0_5 = arith.constant 0 : index
    %5 = vector.load %arg4[%c0_4, %c0_5] : memref<128x128xf32, #tpu.memory_space<vmem>>, vector<128x128xf32>
    %cst = arith.constant dense<0.000000e+00> : vector<8x128xf32>
    %6 = tpu.matmul %4, %5, %cst {dimension_numbers = #tpu.dot_dimension_numbers<[1], [0], [0], [1], [0, 0, 1, 1], [], []>} : vector<8x128xf32>, vector<128x128xf32>, vector<8x128xf32> -> vector<8x128xf32>
    %7 = arith.addf %3, %6 : vector<8x128xf32>
    %c0_6 = arith.constant 0 : index
    %c0_7 = arith.constant 0 : index
    %8 = vector.load %arg7[%c0_6, %c0_7] : memref<8x128xf32, #tpu.memory_space<vmem>>, vector<8x128xf32>
    tpu.vector_store %arg7[%c0_6, %c0_7], %7 {strides = array<i32>} : memref<8x128xf32, #tpu.memory_space<vmem>>, vector<8x128xf32>,
    %c0_i32_8 = arith.constant 0 : i32
    %9 = arith.cmpi eq, %arg2, %c0_i32_8 : i32
    %10 = arith.extui %9 : i1 to i32
    %c0_i32_9 = arith.constant 0 : i32
    %11 = arith.cmpi ne, %10, %c0_i32_9 : i32
    scf.if %11 {
      %c0_10 = arith.constant 0 : index
      %c0_11 = arith.constant 0 : index
      %12 = vector.load %arg7[%c0_10, %c0_11] : memref<8x128xf32, #tpu.memory_space<vmem>>, vector<8x128xf32>
      %c0_12 = arith.constant 0 : index
      %c0_13 = arith.constant 0 : index
      %13 = vector.load %arg5[%c0_12, %c0_13] : memref<1x128xf32, #tpu.memory_space<vmem>>, vector<1x128xf32>
      %14 = vector.broadcast %13 : vector<1x128xf32> to vector<8x128xf32>
      %15 = arith.addf %12, %14 : vector<8x128xf32>
      %16 = math.tanh %15 : vector<8x128xf32>
      %c0_14 = arith.constant 0 : index
      %c0_15 = arith.constant 0 : index
      %17 = vector.load %arg6[%c0_14, %c0_15] : memref<8x128xf32, #tpu.memory_space<vmem>>, vector<8x128xf32>
      tpu.vector_store %arg6[%c0_14, %c0_15], %16 {strides = array<i32>} : memref<8x128xf32, #tpu.memory_space<vmem>>, vector<8x128xf32>,
    } else {
    }
    return
  }
  func.func @transform_0(%arg0: i32, %arg1: i32, %arg2: i32) -> (i32, i32) {
    %c0_i32 = arith.constant 0 : i32
    return %arg0, %arg2 : i32, i32
  }
  func.func @transform_1(%arg0: i32, %arg1: i32, %arg2: i32) -> (i32, i32) {
    %c0_i32 = arith.constant 0 : i32
    return %arg2, %arg1 : i32, i32
  }
  func.func @transform_2(%arg0: i32, %arg1: i32, %arg2: i32) -> (i32, i32) {
    %c0_i32 = arith.constant 0 : i32
    %c0_i32_0 = arith.constant 0 : i32
    return %c0_i32, %arg1 : i32, i32
  }
  func.func @transform_3(%arg0: i32, %arg1: i32, %arg2: i32) -> (i32, i32) {
    %c0_i32 = arith.constant 0 : i32
    return %arg0, %arg1 : i32, i32
  }
}

</mosaic_0001>

<llo_original>
// kernel: rnn_cell.1
$region0: #{rnn_cell.1}
  #allocation0 [shape = 'u32[]', space=smem, size = 0x4, offset = 0x4, fixed_abs, tag = 'smem constant byte address 0x4 - core index']
  #allocation1 [shape = 'u32[144,128]{1,0:T(1,128)}', space=vmem, size = 0x12000, scoped, tag = 'internal scratch']
  #allocation2 [shape = 'f32[8,128]{1,0:T(8,128)}', space=vmem, size = 0x1000, scoped, tag = 'scratch operand']
  %s0 = inlined_call_operand.vmem [shape: f32[8,128], index: 0, kind: input, shape index: {}]
  %s1 = inlined_call_operand.hbm [shape: f32[128,128], index: 1, kind: input, shape index: {}]
  %s2 = inlined_call_operand.vmem [shape: f32[1,128], index: 2, kind: input, shape index: {}]
  %s3 = inlined_call_operand.vmem [shape: f32[8,128], index: 3, kind: output, shape index: {}]
  %s4 = sld [smem:[#allocation0]]
  $region34: #{rnn_cell.1} parent=0
    _
  %s6 = ssub.s32 1, %s4
  %s7 = scalar_select 0, %s6, %s4
  $region1: #{rnn_cell.1} parent=0
    #allocation3 [shape = 'u8[65536]{0}', space=vmem, size = 0x10000, scoped, tag = 'input window, operand 1, single buffered']
    #allocation4 [shape = 's32[1]{0}', space=sflag, size = 0x4, scoped, tag = 'scoped memory for rnn_cell.1']
    %8 = vsyncpa [#allocation4], 0
    // Predicated region
    $region2: #{rnn_cell.1} parent=1 // pred_check
      _
    $region3: #{rnn_cell.1} parent=1 // pred_check_branch
      %10 = sbr.rel (0) target = $region5
    $region4: #{rnn_cell.1} parent=1 // pred_region
      _
    $region5: #{rnn_cell.1} parent=1 // pred_fallthru
      _
    // Predicated region
    $region6: #{rnn_cell.1} parent=1 // pred_check
      _
    $region7: #{rnn_cell.1} parent=1 // pred_check_branch
      %12 = sbr.rel (0) target = $region9
    $region8: #{rnn_cell.1} parent=1 // pred_region
      %s14 = ssub.s32 2048, 2048
      %15 = vsyncadd [#allocation4], %s14
      %s16 = sshll.u32 [#allocation3], 4
      %s17 = int_to_ptr.vmem [resolvable:$true] %s16
      %22 = dma.hbm_to_vmem [thread:$0]  %s1, 2048, %s17, [#allocation4], 128, 128, 8
    $region9: #{rnn_cell.1} parent=1 // pred_fallthru
      _
    // Predicated region
    $region10: #{rnn_cell.1} parent=1 // pred_check
      _
    $region11: #{rnn_cell.1} parent=1 // pred_check_branch
      %24 = sbr.rel (0) target = $region13
    $region12: #{rnn_cell.1} parent=1 // pred_region
      _
    $region13: #{rnn_cell.1} parent=1 // pred_fallthru
      _
    // Predicated region
    $region14: #{rnn_cell.1} parent=1 // pred_check
      _
    $region15: #{rnn_cell.1} parent=1 // pred_check_branch
      %26 = sbr.rel (0) target = $region17
    $region16: #{rnn_cell.1} parent=1 // pred_region
      %27 = dma.done [#allocation4], 2048
    $region17: #{rnn_cell.1} parent=1 // pred_fallthru
      _
    %p28 = scmp.eq.s32.totalorder 0, 0
    // Predicated region
    $region18: #{rnn_cell.1} parent=1 // pred_check
      %p29 = pneg %p28
    $region19: #{rnn_cell.1} parent=1 // pred_check_branch
      %31 = sbr.rel (%p29) target = $region21
    $region20: #{rnn_cell.1} parent=1 // pred_region
      %32 = vst [vmem:[#allocation2] sm:$0xff] 0.0
    $region21: #{rnn_cell.1} parent=1 // pred_fallthru
      _
    %v33 = vld [vmem:[#allocation2] sm:$0xff]
    %v34 = vld [vmem:[%s0] sm:$0xff]
    %v35 = vld [vmem:[#allocation3] sm:$0xff]
    %v36 = vld [vmem:[#allocation3 + $0x8] sm:$0xff]
    %v37 = vld [vmem:[#allocation3 + $0x10] sm:$0xff]
    %v38 = vld [vmem:[#allocation3 + $0x18] sm:$0xff]
    %v39 = vld [vmem:[#allocation3 + $0x20] sm:$0xff]
    %v40 = vld [vmem:[#allocation3 + $0x28] sm:$0xff]
    %v41 = vld [vmem:[#allocation3 + $0x30] sm:$0xff]
    %v42 = vld [vmem:[#allocation3 + $0x38] sm:$0xff]
    %v43 = vld [vmem:[#allocation3 + $0x40] sm:$0xff]
    %v44 = vld [vmem:[#allocation3 + $0x48] sm:$0xff]
    %v45 = vld [vmem:[#allocation3 + $0x50] sm:$0xff]
    %v46 = vld [vmem:[#allocation3 + $0x58] sm:$0xff]
    %v47 = vld [vmem:[#allocation3 + $0x60] sm:$0xff]
    %v48 = vld [vmem:[#allocation3 + $0x68] sm:$0xff]
    %v49 = vld [vmem:[#allocation3 + $0x70] sm:$0xff]
    %v50 = vld [vmem:[#allocation3 + $0x78] sm:$0xff]
    %51 = vmatprep.subr.mxu0 0.0
    %52 = vmatpush1.msra.mxu0 %v35
    %53 = vmatprep.subr.mxu0 0.0
    %54 = vmatpush1.msra.mxu0 %v36
    %55 = vmatprep.subr.mxu0 0.0
    %56 = vmatpush1.msra.mxu0 %v37
    %57 = vmatprep.subr.mxu0 0.0
    %58 = vmatpush1.msra.mxu0 %v38
    %59 = vmatprep.subr.mxu0 0.0
    %60 = vmatpush1.msra.mxu0 %v39
    %61 = vmatprep.subr.mxu0 0.0
    %62 = vmatpush1.msra.mxu0 %v40
    %63 = vmatprep.subr.mxu0 0.0
    %64 = vmatpush1.msra.mxu0 %v41
    %65 = vmatprep.subr.mxu0 0.0
    %66 = vmatpush1.msra.mxu0 %v42
    %67 = vmatprep.subr.mxu0 0.0
    %68 = vmatpush1.msra.mxu0 %v43
    %69 = vmatprep.subr.mxu0 0.0
    %70 = vmatpush1.msra.mxu0 %v44
    %71 = vmatprep.subr.mxu0 0.0
    %72 = vmatpush1.msra.mxu0 %v45
    %73 = vmatprep.subr.mxu0 0.0
    %74 = vmatpush1.msra.mxu0 %v46
    %75 = vmatprep.subr.mxu0 0.0
    %76 = vmatpush1.msra.mxu0 %v47
    %77 = vmatprep.subr.mxu0 0.0
    %78 = vmatpush1.msra.mxu0 %v48
    %79 = vmatprep.subr.mxu0 0.0
    %80 = vmatpush1.msra.mxu0 %v49
    %81 = vmatprep.subr.mxu0 0.0
    %82 = vmatpush1.msra.mxu0 %v50
    %83 = vmatprep.subr.mxu0 0.0
    %84 = vmatpush1.msra.mxu0 0.0
    %85 = vmatprep.subr.mxu0 0.0
    %86 = vmatpush1.msra.mxu0 0.0
    %87 = vmatprep.subr.mxu0 0.0
    %88 = vmatpush1.msra.mxu0 0.0
    %89 = vmatprep.subr.mxu0 0.0
    %90 = vmatpush1.msra.mxu0 0.0
    %91 = vmatprep.subr.mxu0 0.0
    %92 = vmatpush1.msra.mxu0 0.0
    %93 = vmatprep.subr.mxu0 0.0
    %94 = vmatpush1.msra.mxu0 0.0
    %95 = vmatprep.subr.mxu0 0.0
    %96 = vmatpush1.msra.mxu0 0.0
    %97 = vmatprep.subr.mxu0 0.0
    %98 = vmatpush1.msra.mxu0 0.0
    %99 = vmatprep.subr.mxu0 0.0
    %100 = vmatpush1.msra.mxu0 0.0
    %101 = vmatprep.subr.mxu0 0.0
    %102 = vmatpush1.msra.mxu0 0.0
    %103 = vmatprep.subr.mxu0 0.0
    %104 = vmatpush1.msra.mxu0 0.0
    %105 = vmatprep.subr.mxu0 0.0
    %106 = vmatpush1.msra.mxu0 0.0
    %107 = vmatprep.subr.mxu0 0.0
    %108 = vmatpush1.msra.mxu0 0.0
    %109 = vmatprep.subr.mxu0 0.0
    %110 = vmatpush1.msra.mxu0 0.0
    %111 = vmatprep.subr.mxu0 0.0
    %112 = vmatpush1.msra.mxu0 0.0
    %113 = vmatprep.subr.mxu0 0.0
    %114 = vmatpush1.msra.mxu0 0.0
    %115 = vmatprep.mubr.f32.mxu0 0.0
    %116 = vmatmul.mubr.f32.gmra.mrb[0].mxu0 %v34
    %v117 = vpop.f32.mrb[0].mxu0
    %v118 = vadd.f32 0.0, %v117
    %v119 = vpop.f32.mrb[0].mxu0
    %120 = vdwg.mxu0
    %v121 = vadd.f32 %v33, %v118
    %122 = vst [vmem:[#allocation2] sm:$0xff] %v121
    // Predicated region
    $region22: #{rnn_cell.1} parent=1 // pred_check
      %p123 = pneg %p28
    $region23: #{rnn_cell.1} parent=1 // pred_check_branch
      %125 = sbr.rel (%p123) target = $region25
    $region24: #{rnn_cell.1} parent=1 // pred_region
      %v126 = vld [vmem:[#allocation2] sm:$0xff]
      %v127 = vld [vmem:[%s2] sm:$0x1]
      %v129 = vlaneseq
      %v130 = vshrl.u32 %v129, 7
      %v131 = vsub.s32 0, %v130
      %v132 = vrot.slane %v127, %v131
      %v134 = vadd.f32 %v126, %v132
      %v135 = vtanh.pop %v134
      %136 = vst [vmem:[%s3] sm:$0xff] %v135
    $region25: #{rnn_cell.1} parent=1 // pred_fallthru
      _
    // Predicated region
    $region26: #{rnn_cell.1} parent=1 // pred_check
      _
    $region27: #{rnn_cell.1} parent=1 // pred_check_branch
      %138 = sbr.rel (0) target = $region29
    $region28: #{rnn_cell.1} parent=1 // pred_region
      _
    $region29: #{rnn_cell.1} parent=1 // pred_fallthru
      _
    // Predicated region
    $region30: #{rnn_cell.1} parent=1 // pred_check
      _
    $region31: #{rnn_cell.1} parent=1 // pred_check_branch
      %140 = sbr.rel (0) target = $region33
    $region32: #{rnn_cell.1} parent=1 // pred_region
      _
    $region33: #{rnn_cell.1} parent=1 // pred_fallthru
      _
    %141 = vsyncpa [#allocation4], 1

</llo_original>
